<compile_context>
chip_gen: v7x
topology: tpu7x:2x2x1
jax: 0.10.0
libtpu: 0.0.40
codegen_flags: <defaults>
</compile_context>

<pallas_src>
import functools

import jax
import jax.numpy as jnp
from jax.experimental import pallas as pl
from jax.experimental.pallas import tpu as pltpu


def _kl_kernel(probs_ref, golds_ref, mask_ref, kl_ref, *, n_valid_rows):
    """One row-tile: log_softmax(probs), softmax(golds) + analytic log-softmax,
    KL sum over C, mask, lane-dense per-row output."""
    tile = mask_ref.shape[1]

    x = probs_ref[...].astype(jnp.float32)   # (TILE, C) logits
    g = golds_ref[...].astype(jnp.float32)   # (TILE, C) logits
    m = mask_ref[...]                        # (1, TILE) float32

    # log_softmax(probs) over last axis (numerically stable)
    x_max = jnp.max(x, axis=-1, keepdims=True)
    x_sh = x - x_max
    logp = x_sh - jnp.log(jnp.sum(jnp.exp(x_sh), axis=-1, keepdims=True))

    # softmax(golds) + analytic log-softmax (reuses g_exp, no per-element log)
    g_max = jnp.max(g, axis=-1, keepdims=True)
    g_sh = g - g_max
    g_exp = jnp.exp(g_sh)
    g_sum = jnp.sum(g_exp, axis=-1, keepdims=True)
    log_gp = g_sh - jnp.log(g_sum)
    gp = g_exp * pl.reciprocal(g_sum, approx=False)

    # torch.nn.KLDivLoss(reduction='none'): target * (log(target) - input),
    # zeroed where target <= 0. (gp never hits log(0) here: log_gp is analytic.)
    term = jnp.where(gp > 0, gp * (log_gp - logp), 0.0)

    # per-row KL, masked, written lane-dense as a (1, TILE) row
    kl_row = jnp.sum(term, axis=-1).reshape(1, tile) * m

    # zero rows that fall past the true row count (tail tile reads OOB garbage)
    row0 = pl.program_id(0) * tile
    row_ids = row0 + jax.lax.broadcasted_iota(jnp.int32, (1, tile), 1)
    kl_ref[...] = jnp.where(row_ids < n_valid_rows, kl_row, 0.0)


def _pick_tile_rows(n_rows, n_cols, in_itemsize):
    """Largest row tile (multiple of 8) whose double-buffered working set fits
    a conservative 16 MiB VMEM budget (safe vs v5e 16 MiB / v6e-v7x 32 MiB
    scoped defaults and v7x's 64 MiB physical ceiling)."""
    budget = 16 * 1024 * 1024
    tile = 8
    for cand in (1024, 512, 256, 128, 64, 32, 16, 8):
        est = 2 * 2 * cand * n_cols * in_itemsize   # probs + golds, double-buffered
        est += 2 * cand * 4                          # mask (1, tile) blocks
        est += 2 * 8 * cand * 4                      # (1, tile) output, sublane-padded
        if est <= budget:
            tile = cand
            break
    # never make the block taller than the array (avoid degenerate huge tiles)
    if n_rows >= 8:
        tile = min(tile, (n_rows // 8) * 8)
    return tile


@functools.partial(jax.jit, static_argnames=("reduction", "contrib", "maximize"))
def kl_loss(probs, golds, mask, *, reduction="mean", contrib=1.0, maximize=False):
    """JAX/Pallas equivalent of KLLoss.forward with mode='logits',
    goldmode='logits'."""
    B, Tp, C = probs.shape
    Tg = golds.shape[1]

    # sequence-length alignment (uniform-row extension or truncation)
    if Tp < Tg:
        ext = jnp.ones((B, Tg - Tp, C), dtype=probs.dtype) / C
        probs = jnp.concatenate([probs, ext], axis=1)
    else:
        probs = probs[:, :Tg]

    N = B * Tg
    p2 = probs.reshape(N, C)            # keep native dtype (bf16 stays bf16)
    g2 = golds.reshape(N, C)

    tile = _pick_tile_rows(N, C, jnp.dtype(p2.dtype).itemsize)
    num_tiles = pl.cdiv(N, tile)
    n_rows_pad = num_tiles * tile

    # only the tiny mask gets padded/reshaped; big tensors are left untouched
    m_flat = mask.reshape(N).astype(jnp.float32)
    if n_rows_pad != N:
        m_flat = jnp.concatenate(
            [m_flat, jnp.zeros((n_rows_pad - N,), jnp.float32)])
    m2 = m_flat.reshape(num_tiles, tile)

    kl_tiles = pl.pallas_call(
        functools.partial(_kl_kernel, n_valid_rows=N),
        out_shape=jax.ShapeDtypeStruct((num_tiles, tile), jnp.float32),
        grid_spec=pltpu.PrefetchScalarGridSpec(
            num_scalar_prefetch=0,
            grid=(num_tiles,),
            in_specs=[
                pl.BlockSpec((tile, C), lambda i: (i, 0)),
                pl.BlockSpec((tile, C), lambda i: (i, 0)),
                pl.BlockSpec((1, tile), lambda i: (i, 0)),
            ],
            out_specs=pl.BlockSpec((1, tile), lambda i: (i, 0)),
        ),
        compiler_params=pltpu.CompilerParams(
            dimension_semantics=("parallel",),
            vmem_limit_bytes=32 * 1024 * 1024,
        ),
    )(p2, g2, m2)

    mult = -1.0 if maximize else 1.0
    if reduction == "mean":
        ret = jnp.sum(kl_tiles) / jnp.sum(mask.astype(jnp.float32))
    elif reduction == "sum":
        ret = jnp.sum(kl_tiles)
    elif reduction == "none" or reduction is None:
        ret = kl_tiles.reshape(-1)[:N].reshape(B, Tg)
    else:
        raise Exception(f"Unknown reduction '{reduction}'")
    ret = ret * contrib * mult
    return {"kl": ret, "loss": ret}


def _ref_kl(probs, golds, mask):
    """Pure-JAX reference mirroring the PyTorch module (defaults)."""
    B, Tp, C = probs.shape
    Tg = golds.shape[1]
    if Tp < Tg:
        ext = jnp.ones((B, Tg - Tp, C), dtype=probs.dtype) / C
        probs = jnp.concatenate([probs, ext], axis=1)
    else:
        probs = probs[:, :Tg]
    logp = jax.nn.log_softmax(probs, -1)
    gp = jax.nn.softmax(golds, -1)
    kl = jnp.where(gp > 0, gp * (jnp.log(gp) - logp), 0.0)
    kl_rows = kl.sum(-1) * mask
    return kl_rows.sum() / mask.sum(), kl_rows


if __name__ == "__main__":
    key = jax.random.PRNGKey(0)
    k1, k2, k3 = jax.random.split(key, 3)

    B, Tp, Tg, C = 2, 6, 8, 32  # Tp < Tg exercises the uniform-extension path
    probs = jax.random.normal(k1, (B, Tp, C), dtype=jnp.float32)
    golds = jax.random.normal(k2, (B, Tg, C), dtype=jnp.float32)
    mask = (jax.random.uniform(k3, (B, Tg)) > 0.25).astype(jnp.float32)
    mask = mask.at[:, 0].set(1.0)  # ensure mask.sum() > 0

    ref_mean, ref_rows = _ref_kl(probs, golds, mask)

    out = kl_loss(probs, golds, mask, reduction="mean")
    loss = jax.block_until_ready(out["loss"])
    assert jnp.allclose(loss, ref_mean, rtol=1e-5, atol=1e-5), (loss, ref_mean)
    assert jnp.allclose(out["kl"], out["loss"])

    out_none = kl_loss(probs, golds, mask, reduction="none")
    rows = jax.block_until_ready(out_none["kl"])
    assert jnp.allclose(rows, ref_rows, rtol=1e-5, atol=1e-5), (rows, ref_rows)

    # non-divisible row count (N=21) exercises the in-kernel tail masking path
    B2, Tp2, Tg2 = 3, 9, 7
    p_b = jax.random.normal(k1, (B2, Tp2, C), dtype=jnp.float32)
    g_b = jax.random.normal(k2, (B2, Tg2, C), dtype=jnp.float32)
    m_b = (jax.random.uniform(k3, (B2, Tg2)) > 0.25).astype(jnp.float32)
    m_b = m_b.at[:, 0].set(1.0)
    out_b = kl_loss(p_b, g_b, m_b, reduction="mean")
    ref_b, _ = _ref_kl(p_b, g_b, m_b)
    loss_b = jax.block_until_ready(out_b["loss"])
    assert jnp.allclose(loss_b, ref_b, rtol=1e-5, atol=1e-5), (loss_b, ref_b)

    print("KERNEL_OK")
</pallas_src>

<mosaic_0001>
module attributes {stable_mosaic.version = 11 : i64} {
  func.func @_kl_kernel(%arg0: i32, %arg1: memref<16x32xf32, #tpu.memory_space<vmem>>, %arg2: memref<16x32xf32, #tpu.memory_space<vmem>>, %arg3: memref<1x16xf32, #tpu.memory_space<vmem>>, %arg4: memref<1x16xf32, #tpu.memory_space<vmem>>) attributes {dimension_semantics = [#tpu.dimension_semantics<parallel>], iteration_bounds = array<i64: 1>, scalar_prefetch = 0 : i64, scratch_operands = 0 : i64, tpu.core_type = #tpu.core_type<tc>, window_params = [{transform_indices = @transform_0, window_bounds = array<i64: 16, 32>}, {transform_indices = @transform_1, window_bounds = array<i64: 16, 32>}, {transform_indices = @transform_2, window_bounds = array<i64: 1, 16>}, {transform_indices = @transform_3, window_bounds = array<i64: 1, 16>}]} {
    %c0 = arith.constant 0 : index
    %c0_0 = arith.constant 0 : index
    %0 = vector.load %arg1[%c0, %c0_0] : memref<16x32xf32, #tpu.memory_space<vmem>>, vector<16x32xf32>
    %c0_1 = arith.constant 0 : index
    %c0_2 = arith.constant 0 : index
    %1 = vector.load %arg2[%c0_1, %c0_2] : memref<16x32xf32, #tpu.memory_space<vmem>>, vector<16x32xf32>
    %c0_3 = arith.constant 0 : index
    %c0_4 = arith.constant 0 : index
    %2 = vector.load %arg3[%c0_3, %c0_4] : memref<1x16xf32, #tpu.memory_space<vmem>>, vector<1x16xf32>
    %cst = arith.constant dense<0xFF800000> : vector<16xf32>
    %3 = vector.multi_reduction <maximumf>, %0, %cst [1] : vector<16x32xf32> to vector<16xf32>
    %4 = vector.shape_cast %3 : vector<16xf32> to vector<16x1xf32>
    %5 = vector.broadcast %4 : vector<16x1xf32> to vector<16x32xf32>
    %6 = arith.subf %0, %5 : vector<16x32xf32>
    %7 = math.exp %6 : vector<16x32xf32>
    %cst_5 = arith.constant dense<0.000000e+00> : vector<16xf32>
    %8 = vector.multi_reduction <add>, %7, %cst_5 [1] : vector<16x32xf32> to vector<16xf32>
    %9 = vector.shape_cast %8 : vector<16xf32> to vector<16x1xf32>
    %10 = math.log %9 : vector<16x1xf32>
    %11 = vector.broadcast %10 : vector<16x1xf32> to vector<16x32xf32>
    %12 = arith.subf %6, %11 : vector<16x32xf32>
    %cst_6 = arith.constant dense<0xFF800000> : vector<16xf32>
    %13 = vector.multi_reduction <maximumf>, %1, %cst_6 [1] : vector<16x32xf32> to vector<16xf32>
    %14 = vector.shape_cast %13 : vector<16xf32> to vector<16x1xf32>
    %15 = vector.broadcast %14 : vector<16x1xf32> to vector<16x32xf32>
    %16 = arith.subf %1, %15 : vector<16x32xf32>
    %17 = math.exp %16 : vector<16x32xf32>
    %cst_7 = arith.constant dense<0.000000e+00> : vector<16xf32>
    %18 = vector.multi_reduction <add>, %17, %cst_7 [1] : vector<16x32xf32> to vector<16xf32>
    %19 = vector.shape_cast %18 : vector<16xf32> to vector<16x1xf32>
    %20 = math.log %19 : vector<16x1xf32>
    %21 = vector.broadcast %20 : vector<16x1xf32> to vector<16x32xf32>
    %22 = arith.subf %16, %21 : vector<16x32xf32>
    %23 = tpu.reciprocal %19 : vector<16x1xf32> -> vector<16x1xf32>
    %24 = vector.broadcast %23 : vector<16x1xf32> to vector<16x32xf32>
    %25 = arith.mulf %17, %24 : vector<16x32xf32>
    %cst_8 = arith.constant 0.000000e+00 : f32
    %26 = vector.broadcast %cst_8 : f32 to vector<16x32xf32>
    %27 = arith.cmpf ogt, %25, %26 : vector<16x32xf32>
    %28 = arith.subf %22, %12 : vector<16x32xf32>
    %29 = arith.mulf %25, %28 : vector<16x32xf32>
    %cst_9 = arith.constant 0.000000e+00 : f32
    %30 = vector.broadcast %cst_9 : f32 to vector<16x32xf32>
    %31 = arith.select %27, %29, %30 : vector<16x32xi1>, vector<16x32xf32>
    %cst_10 = arith.constant dense<0.000000e+00> : vector<16xf32>
    %32 = vector.multi_reduction <add>, %31, %cst_10 [1] : vector<16x32xf32> to vector<16xf32>
    %33 = vector.shape_cast %32 : vector<16xf32> to vector<1x16xf32>
    %34 = arith.mulf %33, %2 : vector<1x16xf32>
    %c16_i32 = arith.constant 16 : i32
    %35 = arith.muli %arg0, %c16_i32 : i32
    %36 = tpu.iota {dimensions = array<i32: 1>} : vector<1x16xi32>
    %37 = vector.broadcast %35 : i32 to vector<1x16xi32>
    %38 = arith.addi %37, %36 : vector<1x16xi32>
    %c16_i32_11 = arith.constant 16 : i32
    %39 = vector.broadcast %c16_i32_11 : i32 to vector<1x16xi32>
    %40 = arith.cmpi slt, %38, %39 : vector<1x16xi32>
    %cst_12 = arith.constant 0.000000e+00 : f32
    %41 = vector.broadcast %cst_12 : f32 to vector<1x16xf32>
    %42 = arith.select %40, %34, %41 : vector<1x16xi1>, vector<1x16xf32>
    %c0_13 = arith.constant 0 : index
    %c0_14 = arith.constant 0 : index
    %43 = vector.load %arg4[%c0_13, %c0_14] : memref<1x16xf32, #tpu.memory_space<vmem>>, vector<1x16xf32>
    tpu.vector_store %arg4[%c0_13, %c0_14], %42 {strides = array<i32>} : memref<1x16xf32, #tpu.memory_space<vmem>>, vector<1x16xf32>,
    return
  }
  func.func @transform_0(%arg0: i32) -> (i32, i32) {
    %c0_i32 = arith.constant 0 : i32
    %c0_i32_0 = arith.constant 0 : i32
    return %arg0, %c0_i32 : i32, i32
  }
  func.func @transform_1(%arg0: i32) -> (i32, i32) {
    %c0_i32 = arith.constant 0 : i32
    %c0_i32_0 = arith.constant 0 : i32
    return %arg0, %c0_i32 : i32, i32
  }
  func.func @transform_2(%arg0: i32) -> (i32, i32) {
    %c0_i32 = arith.constant 0 : i32
    %c0_i32_0 = arith.constant 0 : i32
    return %arg0, %c0_i32 : i32, i32
  }
  func.func @transform_3(%arg0: i32) -> (i32, i32) {
    %c0_i32 = arith.constant 0 : i32
    %c0_i32_0 = arith.constant 0 : i32
    return %arg0, %c0_i32 : i32, i32
  }
}

</mosaic_0001>

<llo_original>
// kernel: kl_loss.1
$region0: #{kl_loss.1}
  #allocation0 [shape = 'u32[]', space=smem, size = 0x4, offset = 0x4, fixed_abs, tag = 'smem constant byte address 0x4 - core index']
  #allocation1 [shape = 'u32[144,128]{1,0:T(1,128)}', space=vmem, size = 0x12000, scoped, tag = 'internal scratch']
  %s0 = inlined_call_operand.vmem [shape: f32[16,32], index: 0, kind: input, shape index: {}]
  %s1 = inlined_call_operand.vmem [shape: f32[16,32], index: 1, kind: input, shape index: {}]
  %s2 = inlined_call_operand.vmem [shape: f32[1,16], index: 2, kind: input, shape index: {}]
  %s3 = inlined_call_operand.vmem [shape: f32[1,16], index: 3, kind: output, shape index: {}]
  %s4 = sld [smem:[#allocation0]]
  $region22: #{kl_loss.1} parent=0
    _
  %s6 = ssub.s32 1, %s4
  %s7 = scalar_select 0, %s6, %s4
  // Predicated region
  $region2: #{kl_loss.1} parent=0 // pred_check
    _
  $region3: #{kl_loss.1} parent=0 // pred_check_branch
    %9 = sbr.rel (0) target = $region5
  $region4: #{kl_loss.1} parent=0 // pred_region
    _
  $region5: #{kl_loss.1} parent=0 // pred_fallthru
    _
  // Predicated region
  $region6: #{kl_loss.1} parent=0 // pred_check
    _
  $region7: #{kl_loss.1} parent=0 // pred_check_branch
    %11 = sbr.rel (0) target = $region9
  $region8: #{kl_loss.1} parent=0 // pred_region
    _
  $region9: #{kl_loss.1} parent=0 // pred_fallthru
    _
  // Predicated region
  $region10: #{kl_loss.1} parent=0 // pred_check
    _
  $region11: #{kl_loss.1} parent=0 // pred_check_branch
    %13 = sbr.rel (0) target = $region13
  $region12: #{kl_loss.1} parent=0 // pred_region
    _
  $region13: #{kl_loss.1} parent=0 // pred_fallthru
    _
  %v14 = vld [vmem:[%s0] sm:$0xff]
  %v15 = vld [vmem:[%s0 + $0x8] sm:$0xff]
  %v16 = vld [vmem:[%s1] sm:$0xff]
  %v17 = vld [vmem:[%s1 + $0x8] sm:$0xff]
  %v18 = vld [vmem:[%s2] sm:$0x1]
  %vm19 = vcmask 261120
  %v20 = vsel %vm19, %v14, -inf
  %21 = vmax.xlane.f32.xlu0 %v20
  %v22 = vpop.xlane.xlu0 %21
  %v23 = vsel %vm19, %v15, -inf
  %24 = vmax.xlane.f32.xlu0 %v23
  %v25 = vpop.xlane.xlu0 %24
  %v26 = vsub.f32 %v14, %v22
  %v27 = vsub.f32 %v15, %v25
  %v28 = vmul.f32 %v26, 1.442695
  %v29 = vpow.pop %v28
  %v30 = vmul.f32 %v27, 1.442695
  %v31 = vpow.pop %v30
  %v32 = vsel %vm19, %v29, 0.0
  %33 = vadd.xlane.f32.xlu0 %v32
  %v34 = vpop.xlane.xlu0 %33
  %v35 = vsel %vm19, %v31, 0.0
  %36 = vadd.xlane.f32.xlu0 %v35
  %v37 = vpop.xlane.xlu0 %36
  %v38 = vlog2.pop %v34
  %v39 = vmul.f32 %v38, 0.6931472
  %v40 = vlog2.pop %v37
  %v41 = vmul.f32 %v40, 0.6931472
  %v42 = vsub.f32 %v26, %v39
  %v43 = vsub.f32 %v27, %v41
  %v44 = vsel %vm19, %v16, -inf
  %45 = vmax.xlane.f32.xlu0 %v44
  %v46 = vpop.xlane.xlu0 %45
  %v47 = vsel %vm19, %v17, -inf
  %48 = vmax.xlane.f32.xlu0 %v47
  %v49 = vpop.xlane.xlu0 %48
  %v50 = vsub.f32 %v16, %v46
  %v51 = vsub.f32 %v17, %v49
  %v52 = vmul.f32 %v50, 1.442695
  %v53 = vpow.pop %v52
  %v54 = vmul.f32 %v51, 1.442695
  %v55 = vpow.pop %v54
  %v56 = vsel %vm19, %v53, 0.0
  %57 = vadd.xlane.f32.xlu0 %v56
  %v58 = vpop.xlane.xlu0 %57
  %v59 = vsel %vm19, %v55, 0.0
  %60 = vadd.xlane.f32.xlu0 %v59
  %v61 = vpop.xlane.xlu0 %60
  %v62 = vlog2.pop %v58
  %v63 = vmul.f32 %v62, 0.6931472
  %v64 = vlog2.pop %v61
  %v65 = vmul.f32 %v64, 0.6931472
  %v66 = vsub.f32 %v50, %v63
  %v67 = vsub.f32 %v51, %v65
  %v68 = vrcp.pop %v58
  %v69 = vrcp.pop %v61
  %v70 = vmul.f32 %v53, %v68
  %v71 = vmul.f32 %v55, %v69
  %vm72 = vcmp.gt.f32.partialorder %v70, 0.0
  %vm73 = vcmp.gt.f32.partialorder %v71, 0.0
  %v74 = vsub.f32 %v66, %v42
  %v75 = vsub.f32 %v67, %v43
  %v76 = vmul.f32 %v70, %v74
  %v77 = vmul.f32 %v71, %v75
  %v78 = vsel %vm72, %v76, 0.0
  %v79 = vsel %vm73, %v77, 0.0
  %v80 = vsel %vm19, %v78, 0.0
  %81 = vadd.xlane.f32.xlu0 %v80
  %v82 = vpop.xlane.xlu0 %81
  %v83 = vsel %vm19, %v79, 0.0
  %84 = vadd.xlane.f32.xlu0 %v83
  %v85 = vpop.xlane.xlu0 %84
  %v87 = vlaneseq
  %v88 = vshrl.u32 %v87, 7
  %v89 = vsub.s32 0, %v88
  %v90 = vrot.slane %v18, %v89
  %92 = vbcast.lane.b32.xlu0 %v90, 256
  %v93 = vpop.permute.xlu0 %92
  %s95 = sor.u32 256, 8
  %96 = vbcast.lane.b32.xlu0 %v90, %s95
  %v97 = vpop.permute.xlu0 %96
  %v100 = vmul.f32 %v82, %v93
  %v101 = vmul.f32 %v85, %v97
  %s102 = smul.u32 0, 16
  %v103 = vlaneseq
  %v104 = vand.u32 %v103, 127
  %v105 = vstv %s102
  %v106 = vadd.s32 %v105, %v104
  %vm107 = vcmp.lt.s32.totalorder %v106, 16
  %110 = vset.pattern.permute.xlu0 0
  %111 = vperm.xlu0 %110, %v100
  %v112 = vpop.permute.xlu0 %111
  %113 = vset.pattern.permute.xlu0 0
  %114 = vperm.xlu0 %113, %v101
  %v115 = vpop.permute.xlu0 %114
  %v116 = vlaneseq
  %v117 = vshrl.u32 %v116, 7
  %v118 = vsub.s32 %v104, %v117
  %v119 = vrot.slane %v112, %v118
  %v120 = vadd.s32 %v104, 4294967288
  %v121 = vlaneseq
  %v122 = vshrl.u32 %v121, 7
  %v123 = vsub.s32 %v120, %v122
  %v124 = vrot.slane %v115, %v123
  %vm125 = vcmask 130112
  %v126 = vsel %vm125, %v124, %v119
  %v128 = vsel %vm107, %v126, 0.0
  %vm129 = vcmask 122880
  %130 = vst.msk [vmem:[%s3] sm:$0x1] %vm129, %v128
  // Predicated region
  $region14: #{kl_loss.1} parent=0 // pred_check
    _
  $region15: #{kl_loss.1} parent=0 // pred_check_branch
    %132 = sbr.rel (0) target = $region17
  $region16: #{kl_loss.1} parent=0 // pred_region
    _
  $region17: #{kl_loss.1} parent=0 // pred_fallthru
    _
  // Predicated region
  $region18: #{kl_loss.1} parent=0 // pred_check
    _
  $region19: #{kl_loss.1} parent=0 // pred_check_branch
    %134 = sbr.rel (0) target = $region21
  $region20: #{kl_loss.1} parent=0 // pred_region
    _
  $region21: #{kl_loss.1} parent=0 // pred_fallthru
    _

</llo_original>
